<compile_context>
chip_gen: v7x
topology: tpu7x:2x2x1
jax: 0.10.0
libtpu: 0.0.40
codegen_flags: <defaults>
</compile_context>

<pallas_src>
import jax
import jax.numpy as jnp
from jax.experimental import pallas as pl
from jax.experimental.pallas import tpu as pltpu

# Rows packed into the lane axis. With the module's dims (D_in=32, H=64,
# D_out=16) this gives fully lane-dense operands: x -> 256 lanes,
# hidden -> 512 lanes, output -> 128 lanes.
PACK = 8


def projector_kernel(x_ref, w1_ref, b1_ref, w2_ref, b2_ref, o_ref):
    # Linear1 + ReLU (MXU matmul, f32 accumulation), then Linear2.
    x = x_ref[...]
    h = jnp.dot(x, w1_ref[...], preferred_element_type=jnp.float32) + b1_ref[...]
    h = jnp.maximum(h, 0.0)  # ReLU
    y = jnp.dot(h, w2_ref[...], preferred_element_type=jnp.float32) + b2_ref[...]
    o_ref[...] = y.astype(o_ref.dtype)


def pack_projector_params(w1, b1, w2, b2, pack=PACK):
    """Block-diagonal weight packing (pack rows into the lane axis).

    In production, call this once and reuse; under jit with constant weights
    it constant-folds anyway.
    """
    eye1 = jnp.eye(pack, dtype=w1.dtype)
    eye2 = jnp.eye(pack, dtype=w2.dtype)
    w1_blk = jnp.kron(eye1, w1)                        # (pack*D_in, pack*H)
    w2_blk = jnp.kron(eye2, w2)                        # (pack*H,  pack*D_out)
    b1_blk = jnp.tile(b1.reshape(1, -1), (1, pack))    # (1, pack*H)
    b2_blk = jnp.tile(b2.reshape(1, -1), (1, pack))    # (1, pack*D_out)
    return w1_blk, b1_blk, w2_blk, b2_blk


def projector_forward(x, w1, b1, w2, b2, *, tile_b=16384):
    """x: (B, D_in); w1: (D_in, H); b1: (1, H); w2: (H, D_out); b2: (1, D_out).

    tile_b is in LOGICAL batch rows (internally converted to packed rows).
    Weights stay resident in VMEM across grid steps; x/out blocks pipeline.
    """
    B, D_in = x.shape
    H = w1.shape[1]
    D_out = w2.shape[1]
    out_dtype = x.dtype

    w1_blk, b1_blk, w2_blk, b2_blk = pack_projector_params(w1, b1, w2, b2)

    # Pad the batch to a multiple of PACK (zeros; sliced off at the end).
    B_pad = ((B + PACK - 1) // PACK) * PACK
    if B_pad != B:
        x = jnp.pad(x, ((0, B_pad - B), (0, 0)))
    rows = B_pad // PACK
    x_packed = x.reshape(rows, PACK * D_in)  # free row-major reshape

    # --- Batch-tile selection (in packed rows) -------------------------------
    tb = max(1, min(tile_b // PACK, rows))
    if rows >= 16:
        # Keep >=2 grid steps so the "parallel" axis can shard across the two
        # TensorCores on v7x (no-op on v5e/v6e which have a single TC).
        half = (((rows + 1) // 2) + 7) // 8 * 8
        tb = min(tb, half)
    if tb < rows:
        # (8,128) rule: a non-full block's sublane dim must be a multiple of 8.
        tb = max(8, (tb // 8) * 8)
    grid = (pl.cdiv(rows, tb),)

    itemsize = jnp.dtype(out_dtype).itemsize
    cost = pl.CostEstimate(
        flops=2 * B_pad * (D_in * H + H * D_out),
        transcendentals=0,
        bytes_accessed=(x_packed.size + rows * PACK * D_out
                        + w1_blk.size + b1_blk.size
                        + w2_blk.size + b2_blk.size) * itemsize,
    )

    y_packed = pl.pallas_call(
        projector_kernel,
        out_shape=jax.ShapeDtypeStruct((rows, PACK * D_out), out_dtype),
        grid=grid,
        in_specs=[
            # x: one packed batch tile per step (pipelined / double-buffered).
            pl.BlockSpec((tb, PACK * D_in), lambda i: (i, 0)),
            # Weights & biases: full blocks, same index every step -> resident.
            pl.BlockSpec(w1_blk.shape, lambda i: (0, 0)),
            pl.BlockSpec(b1_blk.shape, lambda i: (0, 0)),
            pl.BlockSpec(w2_blk.shape, lambda i: (0, 0)),
            pl.BlockSpec(b2_blk.shape, lambda i: (0, 0)),
        ],
        out_specs=pl.BlockSpec((tb, PACK * D_out), lambda i: (i, 0)),
        compiler_params=pltpu.CompilerParams(
            # Packed batch rows are independent -> shard across TCs on v7x.
            dimension_semantics=("parallel",),
        ),
        cost_estimate=cost,
    )(x_packed, w1_blk, b1_blk, w2_blk, b2_blk)

    y = y_packed.reshape(B_pad, D_out)
    return y[:B] if B_pad != B else y


if __name__ == "__main__":
    # Config (small, consistent with the module's __init__; head='sim')
    config = {
        "out_feature_dim": 32,
        "sim_proj_hidden_unit": 64,
        "sim_proj_out": 16,
        "learning_rate": 1e-3,  # optimizer is irrelevant to the forward pass
    }
    B = 8
    D_in = config["out_feature_dim"]
    H = config["sim_proj_hidden_unit"]
    D_out = config["sim_proj_out"]

    key = jax.random.PRNGKey(0)
    kx, k1, k2, k3, k4 = jax.random.split(key, 5)

    # PyTorch Linear-style uniform init (+-1/sqrt(fan_in))
    lim1 = 1.0 / jnp.sqrt(D_in)
    lim2 = 1.0 / jnp.sqrt(H)
    w1 = jax.random.uniform(k1, (D_in, H), jnp.float32, -lim1, lim1)
    b1 = jax.random.uniform(k2, (1, H), jnp.float32, -lim1, lim1)
    w2 = jax.random.uniform(k3, (H, D_out), jnp.float32, -lim2, lim2)
    b2 = jax.random.uniform(k4, (1, D_out), jnp.float32, -lim2, lim2)

    x = jax.random.normal(kx, (B, D_in), jnp.float32)

    # Small-batch path (single packed row, single grid step).
    y = projector_forward(x, w1, b1, w2, b2)
    jax.block_until_ready(y)
    y_ref = jnp.maximum(x @ w1 + b1, 0.0) @ w2 + b2
    assert y.shape == (B, D_out)
    assert jnp.allclose(y, y_ref, atol=1e-5, rtol=1e-5)

    # Larger batch (not a multiple of PACK) exercising padding, the packed
    # lane-dense path, a multi-step pipelined grid, and a partial last block.
    B_big = 4100
    x_big = jax.random.normal(jax.random.PRNGKey(1), (B_big, D_in), jnp.float32)
    y_big = projector_forward(x_big, w1, b1, w2, b2, tile_b=2048)
    jax.block_until_ready(y_big)
    y_big_ref = jnp.maximum(x_big @ w1 + b1, 0.0) @ w2 + b2
    assert y_big.shape == (B_big, D_out)
    assert jnp.allclose(y_big, y_big_ref, atol=1e-4, rtol=1e-5)

    print("KERNEL_OK")
</pallas_src>

<mosaic_0001>
module attributes {stable_mosaic.version = 11 : i64} {
  func.func @projector_kernel(%arg0: i32, %arg1: memref<1x256xf32, #tpu.memory_space<vmem>>, %arg2: memref<256x512xf32, #tpu.memory_space<vmem>>, %arg3: memref<1x512xf32, #tpu.memory_space<vmem>>, %arg4: memref<512x128xf32, #tpu.memory_space<vmem>>, %arg5: memref<1x128xf32, #tpu.memory_space<vmem>>, %arg6: memref<1x128xf32, #tpu.memory_space<vmem>>) attributes {dimension_semantics = [#tpu.dimension_semantics<parallel>], iteration_bounds = array<i64: 1>, scalar_prefetch = 0 : i64, scratch_operands = 0 : i64, tpu.core_type = #tpu.core_type<tc>, window_params = [{transform_indices = @transform_0, window_bounds = array<i64: 1, 256>}, {pipeline_mode = #tpu.pipeline_mode<synchronous>, transform_indices = @transform_1, window_bounds = array<i64: 256, 512>}, {pipeline_mode = #tpu.pipeline_mode<synchronous>, transform_indices = @transform_2, window_bounds = array<i64: 1, 512>}, {pipeline_mode = #tpu.pipeline_mode<synchronous>, transform_indices = @transform_3, window_bounds = array<i64: 512, 128>}, {pipeline_mode = #tpu.pipeline_mode<synchronous>, transform_indices = @transform_4, window_bounds = array<i64: 1, 128>}, {transform_indices = @transform_5, window_bounds = array<i64: 1, 128>}]} {
    %c0 = arith.constant 0 : index
    %c0_0 = arith.constant 0 : index
    %0 = vector.load %arg1[%c0, %c0_0] : memref<1x256xf32, #tpu.memory_space<vmem>>, vector<1x256xf32>
    %c0_1 = arith.constant 0 : index
    %c0_2 = arith.constant 0 : index
    %1 = vector.load %arg2[%c0_1, %c0_2] : memref<256x512xf32, #tpu.memory_space<vmem>>, vector<256x512xf32>
    %cst = arith.constant dense<0.000000e+00> : vector<1x512xf32>
    %2 = tpu.matmul %0, %1, %cst {dimension_numbers = #tpu.dot_dimension_numbers<[1], [0], [0], [1], [0, 0, 1, 1], [], []>} : vector<1x256xf32>, vector<256x512xf32>, vector<1x512xf32> -> vector<1x512xf32>
    %c0_3 = arith.constant 0 : index
    %c0_4 = arith.constant 0 : index
    %3 = vector.load %arg3[%c0_3, %c0_4] : memref<1x512xf32, #tpu.memory_space<vmem>>, vector<1x512xf32>
    %4 = arith.addf %2, %3 : vector<1x512xf32>
    %cst_5 = arith.constant 0.000000e+00 : f32
    %5 = vector.broadcast %cst_5 : f32 to vector<1x512xf32>
    %6 = arith.maximumf %4, %5 : vector<1x512xf32>
    %c0_6 = arith.constant 0 : index
    %c0_7 = arith.constant 0 : index
    %7 = vector.load %arg4[%c0_6, %c0_7] : memref<512x128xf32, #tpu.memory_space<vmem>>, vector<512x128xf32>
    %cst_8 = arith.constant dense<0.000000e+00> : vector<1x128xf32>
    %8 = tpu.matmul %6, %7, %cst_8 {dimension_numbers = #tpu.dot_dimension_numbers<[1], [0], [0], [1], [0, 0, 1, 1], [], []>} : vector<1x512xf32>, vector<512x128xf32>, vector<1x128xf32> -> vector<1x128xf32>
    %c0_9 = arith.constant 0 : index
    %c0_10 = arith.constant 0 : index
    %9 = vector.load %arg5[%c0_9, %c0_10] : memref<1x128xf32, #tpu.memory_space<vmem>>, vector<1x128xf32>
    %10 = arith.addf %8, %9 : vector<1x128xf32>
    %c0_11 = arith.constant 0 : index
    %c0_12 = arith.constant 0 : index
    %11 = vector.load %arg6[%c0_11, %c0_12] : memref<1x128xf32, #tpu.memory_space<vmem>>, vector<1x128xf32>
    tpu.vector_store %arg6[%c0_11, %c0_12], %10 {strides = array<i32>} : memref<1x128xf32, #tpu.memory_space<vmem>>, vector<1x128xf32>,
    return
  }
  func.func @transform_0(%arg0: i32) -> (i32, i32) {
    %c0_i32 = arith.constant 0 : i32
    %c0_i32_0 = arith.constant 0 : i32
    return %arg0, %c0_i32 : i32, i32
  }
  func.func @transform_1(%arg0: i32) -> (i32, i32) {
    %c0_i32 = arith.constant 0 : i32
    %c0_i32_0 = arith.constant 0 : i32
    %c0_i32_1 = arith.constant 0 : i32
    return %c0_i32, %c0_i32_0 : i32, i32
  }
  func.func @transform_2(%arg0: i32) -> (i32, i32) {
    %c0_i32 = arith.constant 0 : i32
    %c0_i32_0 = arith.constant 0 : i32
    %c0_i32_1 = arith.constant 0 : i32
    return %c0_i32, %c0_i32_0 : i32, i32
  }
  func.func @transform_3(%arg0: i32) -> (i32, i32) {
    %c0_i32 = arith.constant 0 : i32
    %c0_i32_0 = arith.constant 0 : i32
    %c0_i32_1 = arith.constant 0 : i32
    return %c0_i32, %c0_i32_0 : i32, i32
  }
  func.func @transform_4(%arg0: i32) -> (i32, i32) {
    %c0_i32 = arith.constant 0 : i32
    %c0_i32_0 = arith.constant 0 : i32
    %c0_i32_1 = arith.constant 0 : i32
    return %c0_i32, %c0_i32_0 : i32, i32
  }
  func.func @transform_5(%arg0: i32) -> (i32, i32) {
    %c0_i32 = arith.constant 0 : i32
    %c0_i32_0 = arith.constant 0 : i32
    return %arg0, %c0_i32 : i32, i32
  }
}

</mosaic_0001>

<llo_original>
// kernel: tpu_custom_call.1
$region0: #{tpu_custom_call.1}
  #allocation0 [shape = 'u32[]', space=smem, size = 0x4, offset = 0x4, fixed_abs, tag = 'smem constant byte address 0x4 - core index']
  #allocation1 [shape = 'u32[144,128]{1,0:T(1,128)}', space=vmem, size = 0x12000, scoped, tag = 'internal scratch']
  %s0 = inlined_call_operand.hbm [shape: f32[1,256], index: 0, kind: input, shape index: {}]
  %s1 = inlined_call_operand.hbm [shape: f32[256,512], index: 1, kind: input, shape index: {}]
  %s2 = inlined_call_operand.vmem [shape: f32[1,512], index: 2, kind: input, shape index: {}]
  %s3 = inlined_call_operand.hbm [shape: f32[512,128], index: 3, kind: input, shape index: {}]
  %s4 = inlined_call_operand.vmem [shape: f32[1,128], index: 4, kind: input, shape index: {}]
  %s5 = inlined_call_operand.hbm [shape: f32[1,128], index: 5, kind: output, shape index: {}]
  %s6 = sld [smem:[#allocation0]]
  $region42: #{tpu_custom_call.1} parent=0
    _
  %s8 = ssub.s32 1, %s6
  %s9 = scalar_select 0, %s8, %s6
  $region1: #{tpu_custom_call.1} parent=0
    #allocation2 [shape = 'u8[1024]{0}', space=vmem, size = 0x400, scoped, tag = 'input window, operand 0, single buffered']
    #allocation3 [shape = 's32[1]{0}', space=sflag, size = 0x4, scoped, tag = 'scoped memory for tpu_custom_call.1']
    #allocation4 [shape = 's32[1]{0}', space=sflag, size = 0x4, scoped, tag = 'scoped memory for tpu_custom_call.1']
    #allocation5 [shape = 'u8[524288]{0}', space=vmem, size = 0x80000, scoped, tag = 'input window, operand 1, single buffered']
    #allocation6 [shape = 's32[1]{0}', space=sflag, size = 0x4, scoped, tag = 'scoped memory for tpu_custom_call.1']
    #allocation7 [shape = 'u8[262144]{0}', space=vmem, size = 0x40000, scoped, tag = 'input window, operand 3, single buffered']
    #allocation8 [shape = 'u8[512]{0}', space=vmem, size = 0x400, scoped, tag = 'output window, operand 0, single buffered']
    %10 = vsyncpa [#allocation3], 0
    %11 = vsyncpa [#allocation6], 0
    %12 = vsyncpa [#allocation4], 0
    // Predicated region
    $region2: #{tpu_custom_call.1} parent=1 // pred_check
      _
    $region3: #{tpu_custom_call.1} parent=1 // pred_check_branch
      %14 = sbr.rel (0) target = $region5
    $region4: #{tpu_custom_call.1} parent=1 // pred_region
      %s16 = ssub.s32 32, 32
      %17 = vsyncadd [#allocation3], %s16
      %s19 = sshll.u32 [#allocation2], 4
      %s20 = int_to_ptr.vmem [resolvable:$true] %s19
      %22 = dma.hbm_to_vmem [thread:$0]  %s0, 32, %s20, [#allocation3]
    $region5: #{tpu_custom_call.1} parent=1 // pred_fallthru
      _
    // Predicated region
    $region6: #{tpu_custom_call.1} parent=1 // pred_check
      _
    $region7: #{tpu_custom_call.1} parent=1 // pred_check_branch
      %24 = sbr.rel (0) target = $region9
    $region8: #{tpu_custom_call.1} parent=1 // pred_region
      %s26 = ssub.s32 16384, 16384
      %27 = vsyncadd [#allocation6], %s26
      %s28 = sshll.u32 [#allocation5], 4
      %s29 = int_to_ptr.vmem [resolvable:$true] %s28
      %34 = dma.hbm_to_vmem [thread:$0]  %s1, 16384, %s29, [#allocation6], 512, 512, 32
    $region9: #{tpu_custom_call.1} parent=1 // pred_fallthru
      _
    // Predicated region
    $region10: #{tpu_custom_call.1} parent=1 // pred_check
      _
    $region11: #{tpu_custom_call.1} parent=1 // pred_check_branch
      %36 = sbr.rel (0) target = $region13
    $region12: #{tpu_custom_call.1} parent=1 // pred_region
      _
    $region13: #{tpu_custom_call.1} parent=1 // pred_fallthru
      _
    // Predicated region
    $region14: #{tpu_custom_call.1} parent=1 // pred_check
      _
    $region15: #{tpu_custom_call.1} parent=1 // pred_check_branch
      %38 = sbr.rel (0) target = $region17
    $region16: #{tpu_custom_call.1} parent=1 // pred_region
      %s40 = ssub.s32 8192, 8192
      %41 = vsyncadd [#allocation6], %s40
      %s42 = sshll.u32 [#allocation7], 4
      %s43 = int_to_ptr.vmem [resolvable:$true] %s42
      %48 = dma.hbm_to_vmem [thread:$0]  %s3, 8192, %s43, [#allocation6], 128, 128, 8
    $region17: #{tpu_custom_call.1} parent=1 // pred_fallthru
      _
    // Predicated region
    $region18: #{tpu_custom_call.1} parent=1 // pred_check
      _
    $region19: #{tpu_custom_call.1} parent=1 // pred_check_branch
      %50 = sbr.rel (0) target = $region21
    $region20: #{tpu_custom_call.1} parent=1 // pred_region
      _
    $region21: #{tpu_custom_call.1} parent=1 // pred_fallthru
      _
    // Predicated region
    $region22: #{tpu_custom_call.1} parent=1 // pred_check
      _
    $region23: #{tpu_custom_call.1} parent=1 // pred_check_branch
      %52 = sbr.rel (0) target = $region25
    $region24: #{tpu_custom_call.1} parent=1 // pred_region
      %53 = dma.done [#allocation3], 32
    $region25: #{tpu_custom_call.1} parent=1 // pred_fallthru
      _
    // Predicated region
    $region26: #{tpu_custom_call.1} parent=1 // pred_check
      _
    $region27: #{tpu_custom_call.1} parent=1 // pred_check_branch
      %55 = sbr.rel (0) target = $region29
    $region28: #{tpu_custom_call.1} parent=1 // pred_region
      %56 = dma.done [#allocation6], 16384
    $region29: #{tpu_custom_call.1} parent=1 // pred_fallthru
      _
    // Predicated region
    $region30: #{tpu_custom_call.1} parent=1 // pred_check
      _
    $region31: #{tpu_custom_call.1} parent=1 // pred_check_branch
      %58 = sbr.rel (0) target = $region33
    $region32: #{tpu_custom_call.1} parent=1 // pred_region
      %59 = dma.done [#allocation6], 8192
    $region33: #{tpu_custom_call.1} parent=1 // pred_fallthru
      _
    %v60 = vld [vmem:[#allocation2] sm:$0x3]
    %v61 = vld [vmem:[#allocation5] sm:$0xff]
    %v62 = vld [vmem:[#allocation5 + $0x8] sm:$0xff]
    %v63 = vld [vmem:[#allocation5 + $0x10] sm:$0xff]
    %v64 = vld [vmem:[#allocation5 + $0x18] sm:$0xff]
    %v65 = vld [vmem:[#allocation5 + $0x20] sm:$0xff]
    %v66 = vld [vmem:[#allocation5 + $0x28] sm:$0xff]
    %v67 = vld [vmem:[#allocation5 + $0x30] sm:$0xff]
    %v68 = vld [vmem:[#allocation5 + $0x38] sm:$0xff]
    %v69 = vld [vmem:[#allocation5 + $0x40] sm:$0xff]
    %v70 = vld [vmem:[#allocation5 + $0x48] sm:$0xff]
    %v71 = vld [vmem:[#allocation5 + $0x50] sm:$0xff]
    %v72 = vld [vmem:[#allocation5 + $0x58] sm:$0xff]
    %v73 = vld [vmem:[#allocation5 + $0x60] sm:$0xff]
    %v74 = vld [vmem:[#allocation5 + $0x68] sm:$0xff]
    %v75 = vld [vmem:[#allocation5 + $0x70] sm:$0xff]
    %v76 = vld [vmem:[#allocation5 + $0x78] sm:$0xff]
    %v77 = vld [vmem:[#allocation5 + $0x80] sm:$0xff]
    %v78 = vld [vmem:[#allocation5 + $0x88] sm:$0xff]
    %v79 = vld [vmem:[#allocation5 + $0x90] sm:$0xff]
    %v80 = vld [vmem:[#allocation5 + $0x98] sm:$0xff]
    %v81 = vld [vmem:[#allocation5 + $0xa0] sm:$0xff]
    %v82 = vld [vmem:[#allocation5 + $0xa8] sm:$0xff]
    %v83 = vld [vmem:[#allocation5 + $0xb0] sm:$0xff]
    %v84 = vld [vmem:[#allocation5 + $0xb8] sm:$0xff]
    %v85 = vld [vmem:[#allocation5 + $0xc0] sm:$0xff]
    %v86 = vld [vmem:[#allocation5 + $0xc8] sm:$0xff]
    %v87 = vld [vmem:[#allocation5 + $0xd0] sm:$0xff]
    %v88 = vld [vmem:[#allocation5 + $0xd8] sm:$0xff]
    %v89 = vld [vmem:[#allocation5 + $0xe0] sm:$0xff]
    %v90 = vld [vmem:[#allocation5 + $0xe8] sm:$0xff]
    %v91 = vld [vmem:[#allocation5 + $0xf0] sm:$0xff]
    %v92 = vld [vmem:[#allocation5 + $0xf8] sm:$0xff]
    %v93 = vld [vmem:[#allocation5 + $0x100] sm:$0xff]
    %v94 = vld [vmem:[#allocation5 + $0x108] sm:$0xff]
    %v95 = vld [vmem:[#allocation5 + $0x110] sm:$0xff]
    %v96 = vld [vmem:[#allocation5 + $0x118] sm:$0xff]
    %v97 = vld [vmem:[#allocation5 + $0x120] sm:$0xff]
    %v98 = vld [vmem:[#allocation5 + $0x128] sm:$0xff]
    %v99 = vld [vmem:[#allocation5 + $0x130] sm:$0xff]
    %v100 = vld [vmem:[#allocation5 + $0x138] sm:$0xff]
    %v101 = vld [vmem:[#allocation5 + $0x140] sm:$0xff]
    %v102 = vld [vmem:[#allocation5 + $0x148] sm:$0xff]
    %v103 = vld [vmem:[#allocation5 + $0x150] sm:$0xff]
    %v104 = vld [vmem:[#allocation5 + $0x158] sm:$0xff]
    %v105 = vld [vmem:[#allocation5 + $0x160] sm:$0xff]
    %v106 = vld [vmem:[#allocation5 + $0x168] sm:$0xff]
    %v107 = vld [vmem:[#allocation5 + $0x170] sm:$0xff]
    %v108 = vld [vmem:[#allocation5 + $0x178] sm:$0xff]
    %v109 = vld [vmem:[#allocation5 + $0x180] sm:$0xff]
    %v110 = vld [vmem:[#allocation5 + $0x188] sm:$0xff]
    %v111 = vld [vmem:[#allocation5 + $0x190] sm:$0xff]
    %v112 = vld [vmem:[#allocation5 + $0x198] sm:$0xff]
    %v113 = vld [vmem:[#allocation5 + $0x1a0] sm:$0xff]
    %v114 = vld [vmem:[#allocation5 + $0x1a8] sm:$0xff]
    %v115 = vld [vmem:[#allocation5 + $0x1b0] sm:$0xff]
    %v116 = vld [vmem:[#allocation5 + $0x1b8] sm:$0xff]
    %v117 = vld [vmem:[#allocation5 + $0x1c0] sm:$0xff]
    %v118 = vld [vmem:[#allocation5 + $0x1c8] sm:$0xff]
    %v119 = vld [vmem:[#allocation5 + $0x1d0] sm:$0xff]
    %v120 = vld [vmem:[#allocation5 + $0x1d8] sm:$0xff]
    %v121 = vld [vmem:[#allocation5 + $0x1e0] sm:$0xff]
    %v122 = vld [vmem:[#allocation5 + $0x1e8] sm:$0xff]
    %v123 = vld [vmem:[#allocation5 + $0x1f0] sm:$0xff]
    %v124 = vld [vmem:[#allocation5 + $0x1f8] sm:$0xff]
    %v125 = vld [vmem:[#allocation5 + $0x200] sm:$0xff]
    %v126 = vld [vmem:[#allocation5 + $0x208] sm:$0xff]
    %v127 = vld [vmem:[#allocation5 + $0x210] sm:$0xff]
    %v128 = vld [vmem:[#allocation5 + $0x218] sm:$0xff]
    %v129 = vld [vmem:[#allocation5 + $0x220] sm:$0xff]
    %v130 = vld [vmem:[#allocation5 + $0x228] sm:$0xff]
    %v131 = vld [vmem:[#allocation5 + $0x230] sm:$0xff]
    %v132 = vld [vmem:[#allocation5 + $0x238] sm:$0xff]
    %v133 = vld [vmem:[#allocation5 + $0x240] sm:$0xff]
    %v134 = vld [vmem:[#allocation5 + $0x248] sm:$0xff]
    %v135 = vld [vmem:[#allocation5 + $0x250] sm:$0xff]
    %v136 = vld [vmem:[#allocation5 + $0x258] sm:$0xff]
    %v137 = vld [vmem:[#allocation5 + $0x260] sm:$0xff]
    %v138 = vld [vmem:[#allocation5 + $0x268] sm:$0xff]
    %v139 = vld [vmem:[#allocation5 + $0x270] sm:$0xff]
    %v140 = vld [vmem:[#allocation5 + $0x278] sm:$0xff]
    %v141 = vld [vmem:[#allocation5 + $0x280] sm:$0xff]
    %v142 = vld [vmem:[#allocation5 + $0x288] sm:$0xff]
    %v143 = vld [vmem:[#allocation5 + $0x290] sm:$0xff]
    %v144 = vld [vmem:[#allocation5 + $0x298] sm:$0xff]
    %v145 = vld [vmem:[#allocation5 + $0x2a0] sm:$0xff]
    %v146 = vld [vmem:[#allocation5 + $0x2a8] sm:$0xff]
    %v147 = vld [vmem:[#allocation5 + $0x2b0] sm:$0xff]
    %v148 = vld [vmem:[#allocation5 + $0x2b8] sm:$0xff]
    %v149 = vld [vmem:[#allocation5 + $0x2c0] sm:$0xff]
    %v150 = vld [vmem:[#allocation5 + $0x2c8] sm:$0xff]
    %v151 = vld [vmem:[#allocation5 + $0x2d0] sm:$0xff]
    %v152 = vld [vmem:[#allocation5 + $0x2d8] sm:$0xff]
    %v153 = vld [vmem:[#allocation5 + $0x2e0] sm:$0xff]
    %v154 = vld [vmem:[#allocation5 + $0x2e8] sm:$0xff]
    %v155 = vld [vmem:[#allocation5 + $0x2f0] sm:$0xff]
    %v156 = vld [vmem:[#allocation5 + $0x2f8] sm:$0xff]
    %v157 = vld [vmem:[#allocation5 + $0x300] sm:$0xff]
    %v158 = vld [vmem:[#allocation5 + $0x308] sm:$0xff]
    %v159 = vld [vmem:[#allocation5 + $0x310] sm:$0xff]
    %v160 = vld [vmem:[#allocation5 + $0x318] sm:$0xff]
    %v161 = vld [vmem:[#allocation5 + $0x320] sm:$0xff]
    %v162 = vld [vmem:[#allocation5 + $0x328] sm:$0xff]
    %v163 = vld [vmem:[#allocation5 + $0x330] sm:$0xff]
    %v164 = vld [vmem:[#allocation5 + $0x338] sm:$0xff]
    %v165 = vld [vmem:[#allocation5 + $0x340] sm:$0xff]
    %v166 = vld [vmem:[#allocation5 + $0x348] sm:$0xff]
    %v167 = vld [vmem:[#allocation5 + $0x350] sm:$0xff]
    %v168 = vld [vmem:[#allocation5 + $0x358] sm:$0xff]
    %v169 = vld [vmem:[#allocation5 + $0x360] sm:$0xff]
    %v170 = vld [vmem:[#allocation5 + $0x368] sm:$0xff]
    %v171 = vld [vmem:[#allocation5 + $0x370] sm:$0xff]
    %v172 = vld [vmem:[#allocation5 + $0x378] sm:$0xff]
    %v173 = vld [vmem:[#allocation5 + $0x380] sm:$0xff]
    %v174 = vld [vmem:[#allocation5 + $0x388] sm:$0xff]
    %v175 = vld [vmem:[#allocation5 + $0x390] sm:$0xff]
    %v176 = vld [vmem:[#allocation5 + $0x398] sm:$0xff]
    %v177 = vld [vmem:[#allocation5 + $0x3a0] sm:$0xff]
    %v178 = vld [vmem:[#allocation5 + $0x3a8] sm:$0xff]
    %v179 = vld [vmem:[#allocation5 + $0x3b0] sm:$0xff]
    %v180 = vld [vmem:[#allocation5 + $0x3b8] sm:$0xff]
    %v181 = vld [vmem:[#allocation5 + $0x3c0] sm:$0xff]
    %v182 = vld [vmem:[#allocation5 + $0x3c8] sm:$0xff]
    %v183 = vld [vmem:[#allocation5 + $0x3d0] sm:$0xff]
    %v184 = vld [vmem:[#allocation5 + $0x3d8] sm:$0xff]
    %v185 = vld [vmem:[#allocation5 + $0x3e0] sm:$0xff]
    %v186 = vld [vmem:[#allocation5 + $0x3e8] sm:$0xff]
    %v187 = vld [vmem:[#allocation5 + $0x3f0] sm:$0xff]
    %v188 = vld [vmem:[#allocation5 + $0x3f8] sm:$0xff]
    %v189 = vld [vmem:[%s2] sm:$0xf]
    %v191 = vlaneseq
    %v192 = vshrl.u32 %v191, 7
    %v193 = vsub.s32 0, %v192
    %v194 = vrot.slane %v60, %v193
    %v195 = vlaneseq
    %v196 = vshrl.u32 %v195, 7
    %v197 = vsub.s32 1, %v196
    %v198 = vrot.slane %v60, %v197
    %v202 = vlaneseq
    %v203 = vshrl.u32 %v202, 7
    %v204 = vsub.s32 0, %v203
    %v205 = vrot.slane %v189, %v204
    %v206 = vlaneseq
    %v207 = vshrl.u32 %v206, 7
    %v208 = vsub.s32 1, %v207
    %v209 = vrot.slane %v189, %v208
    %v210 = vlaneseq
    %v211 = vshrl.u32 %v210, 7
    %v212 = vsub.s32 2, %v211
    %v213 = vrot.slane %v189, %v212
    %v214 = vlaneseq
    %v215 = vshrl.u32 %v214, 7
    %v216 = vsub.s32 3, %v215
    %v217 = vrot.slane %v189, %v216
    %222 = vmatprep.subr.mxu0 %v62
    %223 = vmatpush1.msra.mxu0 %v61
    %224 = vmatprep.subr.mxu0 %v66
    %225 = vmatpush1.msra.mxu0 %v65
    %226 = vmatprep.subr.mxu0 %v70
    %227 = vmatpush1.msra.mxu0 %v69
    %228 = vmatprep.subr.mxu0 %v74
    %229 = vmatpush1.msra.mxu0 %v73
    %230 = vmatprep.subr.mxu0 %v78
    %231 = vmatpush1.msra.mxu0 %v77
    %232 = vmatprep.subr.mxu0 %v82
    %233 = vmatpush1.msra.mxu0 %v81
    %234 = vmatprep.subr.mxu0 %v86
    %235 = vmatpush1.msra.mxu0 %v85
    %236 = vmatprep.subr.mxu0 %v90
    %237 = vmatpush1.msra.mxu0 %v89
    %238 = vmatprep.subr.mxu0 %v94
    %239 = vmatpush1.msra.mxu0 %v93
    %240 = vmatprep.subr.mxu0 %v98
    %241 = vmatpush1.msra.mxu0 %v97
    %242 = vmatprep.subr.mxu0 %v102
    %243 = vmatpush1.msra.mxu0 %v101
    %244 = vmatprep.subr.mxu0 %v106
    %245 = vmatpush1.msra.mxu0 %v105
    %246 = vmatprep.subr.mxu0 %v110
    %247 = vmatpush1.msra.mxu0 %v109
    %248 = vmatprep.subr.mxu0 %v114
    %249 = vmatpush1.msra.mxu0 %v113
    %250 = vmatprep.subr.mxu0 %v118
    %251 = vmatpush1.msra.mxu0 %v117
    %252 = vmatprep.subr.mxu0 %v122
    %253 = vmatpush1.msra.mxu0 %v121
    %254 = vmatprep.subr.mxu0 %v126
    %255 = vmatpush1.msra.mxu0 %v125
    %256 = vmatprep.subr.mxu0 %v130
    %257 = vmatpush1.msra.mxu0 %v129
    %258 = vmatprep.subr.mxu0 %v134
    %259 = vmatpush1.msra.mxu0 %v133
    %260 = vmatprep.subr.mxu0 %v138
    %261 = vmatpush1.msra.mxu0 %v137
    %262 = vmatprep.subr.mxu0 %v142
    %263 = vmatpush1.msra.mxu0 %v141
    %264 = vmatprep.subr.mxu0 %v146
    %265 = vmatpush1.msra.mxu0 %v145
    %266 = vmatprep.subr.mxu0 %v150
    %267 = vmatpush1.msra.mxu0 %v149
    %268 = vmatprep.subr.mxu0 %v154
    %269 = vmatpush1.msra.mxu0 %v153
    %270 = vmatprep.subr.mxu0 %v158
    %271 = vmatpush1.msra.mxu0 %v157
    %272 = vmatprep.subr.mxu0 %v162
    %273 = vmatpush1.msra.mxu0 %v161
    %274 = vmatprep.subr.mxu0 %v166
    %275 = vmatpush1.msra.mxu0 %v165
    %276 = vmatprep.subr.mxu0 %v170
    %277 = vmatpush1.msra.mxu0 %v169
    %278 = vmatprep.subr.mxu0 %v174
    %279 = vmatpush1.msra.mxu0 %v173
    %280 = vmatprep.subr.mxu0 %v178
    %281 = vmatpush1.msra.mxu0 %v177
    %282 = vmatprep.subr.mxu0 %v182
    %283 = vmatpush1.msra.mxu0 %v181
    %284 = vmatprep.subr.mxu0 %v186
    %285 = vmatpush1.msra.mxu0 %v185
    %286 = vmatprep.mubr.f32.mxu0 %v198
    %287 = vmatmul.mubr.f32.gmra.mrb[0].mxu0 %v194
    %v288 = vpop.f32.mrb[0].mxu0
    %v289 = vadd.f32 %v205, %v288
    %v290 = vpop.f32.mrb[0].mxu0
    %v291 = vadd.f32 %v209, %v290
    %292 = vdwg.mxu0
    %293 = vmatprep.subr.mxu0 %v64
    %294 = vmatpush1.msra.mxu0 %v63
    %295 = vmatprep.subr.mxu0 %v68
    %296 = vmatpush1.msra.mxu0 %v67
    %297 = vmatprep.subr.mxu0 %v72
    %298 = vmatpush1.msra.mxu0 %v71
    %299 = vmatprep.subr.mxu0 %v76
    %300 = vmatpush1.msra.mxu0 %v75
    %301 = vmatprep.subr.mxu0 %v80
    %302 = vmatpush1.msra.mxu0 %v79
    %303 = vmatprep.subr.mxu0 %v84
    %304 = vmatpush1.msra.mxu0 %v83
    %305 = vmatprep.subr.mxu0 %v88
    %306 = vmatpush1.msra.mxu0 %v87
    %307 = vmatprep.subr.mxu0 %v92
    %308 = vmatpush1.msra.mxu0 %v91
    %309 = vmatprep.subr.mxu0 %v96
    %310 = vmatpush1.msra.mxu0 %v95
    %311 = vmatprep.subr.mxu0 %v100
    %312 = vmatpush1.msra.mxu0 %v99
    %313 = vmatprep.subr.mxu0 %v104
    %314 = vmatpush1.msra.mxu0 %v103
    %315 = vmatprep.subr.mxu0 %v108
    %316 = vmatpush1.msra.mxu0 %v107
    %317 = vmatprep.subr.mxu0 %v112
    %318 = vmatpush1.msra.mxu0 %v111
    %319 = vmatprep.subr.mxu0 %v116
    %320 = vmatpush1.msra.mxu0 %v115
    %321 = vmatprep.subr.mxu0 %v120
    %322 = vmatpush1.msra.mxu0 %v119
    %323 = vmatprep.subr.mxu0 %v124
    %324 = vmatpush1.msra.mxu0 %v123
    %325 = vmatprep.subr.mxu0 %v128
    %326 = vmatpush1.msra.mxu0 %v127
    %327 = vmatprep.subr.mxu0 %v132
    %328 = vmatpush1.msra.mxu0 %v131
    %329 = vmatprep.subr.mxu0 %v136
    %330 = vmatpush1.msra.mxu0 %v135
    %331 = vmatprep.subr.mxu0 %v140
    %332 = vmatpush1.msra.mxu0 %v139
    %333 = vmatprep.subr.mxu0 %v144
    %334 = vmatpush1.msra.mxu0 %v143
    %335 = vmatprep.subr.mxu0 %v148
    %336 = vmatpush1.msra.mxu0 %v147
    %337 = vmatprep.subr.mxu0 %v152
    %338 = vmatpush1.msra.mxu0 %v151
    %339 = vmatprep.subr.mxu0 %v156
    %340 = vmatpush1.msra.mxu0 %v155
    %341 = vmatprep.subr.mxu0 %v160
    %342 = vmatpush1.msra.mxu0 %v159
    %343 = vmatprep.subr.mxu0 %v164
    %344 = vmatpush1.msra.mxu0 %v163
    %345 = vmatprep.subr.mxu0 %v168
    %346 = vmatpush1.msra.mxu0 %v167
    %347 = vmatprep.subr.mxu0 %v172
    %348 = vmatpush1.msra.mxu0 %v171
    %349 = vmatprep.subr.mxu0 %v176
    %350 = vmatpush1.msra.mxu0 %v175
    %351 = vmatprep.subr.mxu0 %v180
    %352 = vmatpush1.msra.mxu0 %v179
    %353 = vmatprep.subr.mxu0 %v184
    %354 = vmatpush1.msra.mxu0 %v183
    %355 = vmatprep.subr.mxu0 %v188
    %356 = vmatpush1.msra.mxu0 %v187
    %357 = vmatprep.mubr.f32.mxu0 %v198
    %358 = vmatmul.mubr.f32.gmra.mrb[0].mxu0 %v194
    %v359 = vpop.f32.mrb[0].mxu0
    %v360 = vadd.f32 %v213, %v359
    %v361 = vpop.f32.mrb[0].mxu0
    %v362 = vadd.f32 %v217, %v361
    %363 = vdwg.mxu0
    %v364 = vmax.f32 %v289, 0.0
    %v365 = vmax.f32 %v291, 0.0
    %v366 = vmax.f32 %v360, 0.0
    %v367 = vmax.f32 %v362, 0.0
    %v368 = vld [vmem:[#allocation7] sm:$0xff]
    %v369 = vld [vmem:[#allocation7 + $0x8] sm:$0xff]
    %v370 = vld [vmem:[#allocation7 + $0x10] sm:$0xff]
    %v371 = vld [vmem:[#allocation7 + $0x18] sm:$0xff]
    %v372 = vld [vmem:[#allocation7 + $0x20] sm:$0xff]
    %v373 = vld [vmem:[#allocation7 + $0x28] sm:$0xff]
    %v374 = vld [vmem:[#allocation7 + $0x30] sm:$0xff]
    %v375 = vld [vmem:[#allocation7 + $0x38] sm:$0xff]
    %v376 = vld [vmem:[#allocation7 + $0x40] sm:$0xff]
    %v377 = vld [vmem:[#allocation7 + $0x48] sm:$0xff]
    %v378 = vld [vmem:[#allocation7 + $0x50] sm:$0xff]
    %v379 = vld [vmem:[#allocation7 + $0x58] sm:$0xff]
    %v380 = vld [vmem:[#allocation7 + $0x60] sm:$0xff]
    %v381 = vld [vmem:[#allocation7 + $0x68] sm:$0xff]
    %v382 = vld [vmem:[#allocation7 + $0x70] sm:$0xff]
    %v383 = vld [vmem:[#allocation7 + $0x78] sm:$0xff]
    %v384 = vld [vmem:[#allocation7 + $0x80] sm:$0xff]
    %v385 = vld [vmem:[#allocation7 + $0x88] sm:$0xff]
    %v386 = vld [vmem:[#allocation7 + $0x90] sm:$0xff]
    %v387 = vld [vmem:[#allocation7 + $0x98] sm:$0xff]
    %v388 = vld [vmem:[#allocation7 + $0xa0] sm:$0xff]
    %v389 = vld [vmem:[#allocation7 + $0xa8] sm:$0xff]
    %v390 = vld [vmem:[#allocation7 + $0xb0] sm:$0xff]
    %v391 = vld [vmem:[#allocation7 + $0xb8] sm:$0xff]
    %v392 = vld [vmem:[#allocation7 + $0xc0] sm:$0xff]
    %v393 = vld [vmem:[#allocation7 + $0xc8] sm:$0xff]
    %v394 = vld [vmem:[#allocation7 + $0xd0] sm:$0xff]
    %v395 = vld [vmem:[#allocation7 + $0xd8] sm:$0xff]
    %v396 = vld [vmem:[#allocation7 + $0xe0] sm:$0xff]
    %v397 = vld [vmem:[#allocation7 + $0xe8] sm:$0xff]
    %v398 = vld [vmem:[#allocation7 + $0xf0] sm:$0xff]
    %v399 = vld [vmem:[#allocation7 + $0xf8] sm:$0xff]
    %v400 = vld [vmem:[#allocation7 + $0x100] sm:$0xff]
    %v401 = vld [vmem:[#allocation7 + $0x108] sm:$0xff]
    %v402 = vld [vmem:[#allocation7 + $0x110] sm:$0xff]
    %v403 = vld [vmem:[#allocation7 + $0x118] sm:$0xff]
    %v404 = vld [vmem:[#allocation7 + $0x120] sm:$0xff]
    %v405 = vld [vmem:[#allocation7 + $0x128] sm:$0xff]
    %v406 = vld [vmem:[#allocation7 + $0x130] sm:$0xff]
    %v407 = vld [vmem:[#allocation7 + $0x138] sm:$0xff]
    %v408 = vld [vmem:[#allocation7 + $0x140] sm:$0xff]
    %v409 = vld [vmem:[#allocation7 + $0x148] sm:$0xff]
    %v410 = vld [vmem:[#allocation7 + $0x150] sm:$0xff]
    %v411 = vld [vmem:[#allocation7 + $0x158] sm:$0xff]
    %v412 = vld [vmem:[#allocation7 + $0x160] sm:$0xff]
    %v413 = vld [vmem:[#allocation7 + $0x168] sm:$0xff]
    %v414 = vld [vmem:[#allocation7 + $0x170] sm:$0xff]
    %v415 = vld [vmem:[#allocation7 + $0x178] sm:$0xff]
    %v416 = vld [vmem:[#allocation7 + $0x180] sm:$0xff]
    %v417 = vld [vmem:[#allocation7 + $0x188] sm:$0xff]
    %v418 = vld [vmem:[#allocation7 + $0x190] sm:$0xff]
    %v419 = vld [vmem:[#allocation7 + $0x198] sm:$0xff]
    %v420 = vld [vmem:[#allocation7 + $0x1a0] sm:$0xff]
    %v421 = vld [vmem:[#allocation7 + $0x1a8] sm:$0xff]
    %v422 = vld [vmem:[#allocation7 + $0x1b0] sm:$0xff]
    %v423 = vld [vmem:[#allocation7 + $0x1b8] sm:$0xff]
    %v424 = vld [vmem:[#allocation7 + $0x1c0] sm:$0xff]
    %v425 = vld [vmem:[#allocation7 + $0x1c8] sm:$0xff]
    %v426 = vld [vmem:[#allocation7 + $0x1d0] sm:$0xff]
    %v427 = vld [vmem:[#allocation7 + $0x1d8] sm:$0xff]
    %v428 = vld [vmem:[#allocation7 + $0x1e0] sm:$0xff]
    %v429 = vld [vmem:[#allocation7 + $0x1e8] sm:$0xff]
    %v430 = vld [vmem:[#allocation7 + $0x1f0] sm:$0xff]
    %v431 = vld [vmem:[#allocation7 + $0x1f8] sm:$0xff]
    %v432 = vld [vmem:[%s4] sm:$0x1]
    %433 = vmatprep.subr.mxu0 0.0
    %434 = vmatpush1.msra.mxu0 %v368
    %435 = vmatprep.subr.mxu0 0.0
    %436 = vmatpush1.msra.mxu0 %v369
    %437 = vmatprep.subr.mxu0 0.0
    %438 = vmatpush1.msra.mxu0 %v370
    %439 = vmatprep.subr.mxu0 0.0
    %440 = vmatpush1.msra.mxu0 %v371
    %441 = vmatprep.subr.mxu0 0.0
    %442 = vmatpush1.msra.mxu0 %v372
    %443 = vmatprep.subr.mxu0 0.0
    %444 = vmatpush1.msra.mxu0 %v373
    %445 = vmatprep.subr.mxu0 0.0
    %446 = vmatpush1.msra.mxu0 %v374
    %447 = vmatprep.subr.mxu0 0.0
    %448 = vmatpush1.msra.mxu0 %v375
    %449 = vmatprep.subr.mxu0 0.0
    %450 = vmatpush1.msra.mxu0 %v376
    %451 = vmatprep.subr.mxu0 0.0
    %452 = vmatpush1.msra.mxu0 %v377
    %453 = vmatprep.subr.mxu0 0.0
    %454 = vmatpush1.msra.mxu0 %v378
    %455 = vmatprep.subr.mxu0 0.0
    %456 = vmatpush1.msra.mxu0 %v379
    %457 = vmatprep.subr.mxu0 0.0
    %458 = vmatpush1.msra.mxu0 %v380
    %459 = vmatprep.subr.mxu0 0.0
    %460 = vmatpush1.msra.mxu0 %v381
    %461 = vmatprep.subr.mxu0 0.0
    %462 = vmatpush1.msra.mxu0 %v382
    %463 = vmatprep.subr.mxu0 0.0
    %464 = vmatpush1.msra.mxu0 %v383
    %465 = vmatprep.subr.mxu0 0.0
    %466 = vmatpush1.msra.mxu0 %v384
    %467 = vmatprep.subr.mxu0 0.0
    %468 = vmatpush1.msra.mxu0 %v385
    %469 = vmatprep.subr.mxu0 0.0
    %470 = vmatpush1.msra.mxu0 %v386
    %471 = vmatprep.subr.mxu0 0.0
    %472 = vmatpush1.msra.mxu0 %v387
    %473 = vmatprep.subr.mxu0 0.0
    %474 = vmatpush1.msra.mxu0 %v388
    %475 = vmatprep.subr.mxu0 0.0
    %476 = vmatpush1.msra.mxu0 %v389
    %477 = vmatprep.subr.mxu0 0.0
    %478 = vmatpush1.msra.mxu0 %v390
    %479 = vmatprep.subr.mxu0 0.0
    %480 = vmatpush1.msra.mxu0 %v391
    %481 = vmatprep.subr.mxu0 0.0
    %482 = vmatpush1.msra.mxu0 %v392
    %483 = vmatprep.subr.mxu0 0.0
    %484 = vmatpush1.msra.mxu0 %v393
    %485 = vmatprep.subr.mxu0 0.0
    %486 = vmatpush1.msra.mxu0 %v394
    %487 = vmatprep.subr.mxu0 0.0
    %488 = vmatpush1.msra.mxu0 %v395
    %489 = vmatprep.subr.mxu0 0.0
    %490 = vmatpush1.msra.mxu0 %v396
    %491 = vmatprep.subr.mxu0 0.0
    %492 = vmatpush1.msra.mxu0 %v397
    %493 = vmatprep.subr.mxu0 0.0
    %494 = vmatpush1.msra.mxu0 %v398
    %495 = vmatprep.subr.mxu0 0.0
    %496 = vmatpush1.msra.mxu0 %v399
    %497 = vmatprep.mubr.f32.mxu0 %v365
    %498 = vmatmul.mubr.f32.gmra.mrb[0].mxu0 %v364
    %v499 = vpop.f32.mrb[0].mxu0
    %v500 = vadd.f32 %v432, %v499
    %v501 = vpop.f32.mrb[0].mxu0
    %502 = vdwg.mxu0
    %503 = vmatprep.subr.mxu0 0.0
    %504 = vmatpush1.msra.mxu0 %v400
    %505 = vmatprep.subr.mxu0 0.0
    %506 = vmatpush1.msra.mxu0 %v401
    %507 = vmatprep.subr.mxu0 0.0
    %508 = vmatpush1.msra.mxu0 %v402
    %509 = vmatprep.subr.mxu0 0.0
    %510 = vmatpush1.msra.mxu0 %v403
    %511 = vmatprep.subr.mxu0 0.0
    %512 = vmatpush1.msra.mxu0 %v404
    %513 = vmatprep.subr.mxu0 0.0
    %514 = vmatpush1.msra.mxu0 %v405
    %515 = vmatprep.subr.mxu0 0.0
    %516 = vmatpush1.msra.mxu0 %v406
    %517 = vmatprep.subr.mxu0 0.0
    %518 = vmatpush1.msra.mxu0 %v407
    %519 = vmatprep.subr.mxu0 0.0
    %520 = vmatpush1.msra.mxu0 %v408
    %521 = vmatprep.subr.mxu0 0.0
    %522 = vmatpush1.msra.mxu0 %v409
    %523 = vmatprep.subr.mxu0 0.0
    %524 = vmatpush1.msra.mxu0 %v410
    %525 = vmatprep.subr.mxu0 0.0
    %526 = vmatpush1.msra.mxu0 %v411
    %527 = vmatprep.subr.mxu0 0.0
    %528 = vmatpush1.msra.mxu0 %v412
    %529 = vmatprep.subr.mxu0 0.0
    %530 = vmatpush1.msra.mxu0 %v413
    %531 = vmatprep.subr.mxu0 0.0
    %532 = vmatpush1.msra.mxu0 %v414
    %533 = vmatprep.subr.mxu0 0.0
    %534 = vmatpush1.msra.mxu0 %v415
    %535 = vmatprep.subr.mxu0 0.0
    %536 = vmatpush1.msra.mxu0 %v416
    %537 = vmatprep.subr.mxu0 0.0
    %538 = vmatpush1.msra.mxu0 %v417
    %539 = vmatprep.subr.mxu0 0.0
    %540 = vmatpush1.msra.mxu0 %v418
    %541 = vmatprep.subr.mxu0 0.0
    %542 = vmatpush1.msra.mxu0 %v419
    %543 = vmatprep.subr.mxu0 0.0
    %544 = vmatpush1.msra.mxu0 %v420
    %545 = vmatprep.subr.mxu0 0.0
    %546 = vmatpush1.msra.mxu0 %v421
    %547 = vmatprep.subr.mxu0 0.0
    %548 = vmatpush1.msra.mxu0 %v422
    %549 = vmatprep.subr.mxu0 0.0
    %550 = vmatpush1.msra.mxu0 %v423
    %551 = vmatprep.subr.mxu0 0.0
    %552 = vmatpush1.msra.mxu0 %v424
    %553 = vmatprep.subr.mxu0 0.0
    %554 = vmatpush1.msra.mxu0 %v425
    %555 = vmatprep.subr.mxu0 0.0
    %556 = vmatpush1.msra.mxu0 %v426
    %557 = vmatprep.subr.mxu0 0.0
    %558 = vmatpush1.msra.mxu0 %v427
    %559 = vmatprep.subr.mxu0 0.0
    %560 = vmatpush1.msra.mxu0 %v428
    %561 = vmatprep.subr.mxu0 0.0
    %562 = vmatpush1.msra.mxu0 %v429
    %563 = vmatprep.subr.mxu0 0.0
    %564 = vmatpush1.msra.mxu0 %v430
    %565 = vmatprep.subr.mxu0 0.0
    %566 = vmatpush1.msra.mxu0 %v431
    %567 = vmatprep.mubr.f32.mxu0 %v367
    %568 = vmatmul.mubr.f32.gmra.mrb[0].mxu0 %v366
    %v569 = vpop.f32.mrb[0].mxu0
    %v570 = vadd.f32 %v500, %v569
    %v571 = vpop.f32.mrb[0].mxu0
    %572 = vdwg.mxu0
    %573 = vst [vmem:[#allocation8] sm:$0x1] %v570
    // Predicated region
    $region34: #{tpu_custom_call.1} parent=1 // pred_check
      _
    $region35: #{tpu_custom_call.1} parent=1 // pred_check_branch
      %575 = sbr.rel (0) target = $region37
    $region36: #{tpu_custom_call.1} parent=1 // pred_region
      %s577 = ssub.s32 16, 16
      %578 = vsyncadd [#allocation4], %s577
      %s580 = sshll.u32 [#allocation8], 4
      %s581 = int_to_ptr.vmem [resolvable:$true] %s580
      %583 = dma.vmem_to_hbm [thread:$0]  %s581, 16, %s5, [#allocation4]
    $region37: #{tpu_custom_call.1} parent=1 // pred_fallthru
      _
    // Predicated region
    $region38: #{tpu_custom_call.1} parent=1 // pred_check
      _
    $region39: #{tpu_custom_call.1} parent=1 // pred_check_branch
      %585 = sbr.rel (0) target = $region41
    $region40: #{tpu_custom_call.1} parent=1 // pred_region
      %586 = dma.done [#allocation4], 16
    $region41: #{tpu_custom_call.1} parent=1 // pred_fallthru
      _
    %587 = vsyncpa [#allocation3], 1
    %588 = vsyncpa [#allocation6], 1
    %589 = vsyncpa [#allocation4], 1

</llo_original>
